<compile_context>
chip_gen: v5e
topology: v5e:2x2
jax: 0.10.0
libtpu: 0.0.40
codegen_flags: <defaults>
</compile_context>

<pallas_src>
import jax
import jax.numpy as jnp
from jax.experimental import pallas as pl
from jax.experimental.pallas import tpu as pltpu

EPS = 1e-5  # BatchNorm2d eps from the module


def relu_conv1x1_bn_kernel(x_ref, w_ref, gamma_ref, beta_ref, o_ref):
    # x_ref:     (Cin, R)   f32   (zero-copy view of the NCHW buffer, N == 1)
    # w_ref:     (Cout, Cin) f32
    # gamma_ref: (Cout, 1)  f32
    # beta_ref:  (Cout, 1)  f32
    # o_ref:     (Cout, R)  f32
    #
    # ReLU in f32 (native on every VPU generation), then cast to bf16 for the
    # MXU.  relu happens before the conv in the module, so this is exact
    # modulo the bf16 rounding of the matmul operands.
    x = jnp.maximum(x_ref[...], 0.0).astype(jnp.bfloat16)   # VPU + cast
    w = w_ref[...].astype(jnp.bfloat16)                     # cast for MXU

    # 1x1 conv over NCHW with N == 1 is exactly Y(Cout,R) = W(Cout,Cin) @ X(Cin,R).
    y = jnp.dot(w, x, preferred_element_type=jnp.float32)   # MXU, f32 accumulate

    # BatchNorm2d (training): per-channel batch mean + *biased* batch variance.
    # Centered two-pass variance for numerical safety (cheap at this size).
    inv_n = 1.0 / y.shape[1]                                 # static (= H*W)
    mean = jnp.sum(y, axis=1, keepdims=True) * inv_n         # (Cout, 1)
    diff = y - mean
    var = jnp.sum(diff * diff, axis=1, keepdims=True) * inv_n
    scale = gamma_ref[...] * jax.lax.rsqrt(var + EPS)        # rsqrt -> EUP
    o_ref[...] = diff * scale + beta_ref[...]                # one fused VPU pass


@jax.jit
def relu_conv1x1_bn(x_nchw, weight, gamma, beta):
    """x_nchw: (1, Cin, H, W) f32; weight: (Cout, Cin[,1,1]) f32; gamma/beta: (Cout,)."""
    N, Cin, H, W = x_nchw.shape
    if N != 1:
        # TODO(synk): N>1 (or very large R) needs an R-tiled grid with
        # accumulated batch statistics.
        raise NotImplementedError("zero-copy NCHW->(Cin,R) path assumes N == 1")
    R = H * W
    Cout = weight.shape[0]

    # Zero-copy reshapes only — no pad, no cast, no transpose in the wrapper.
    x2d = x_nchw.reshape(Cin, R)
    w2d = weight.reshape(Cout, -1)
    assert w2d.shape[1] == Cin, w2d.shape
    gamma2d = gamma.reshape(Cout, 1).astype(jnp.float32)
    beta2d = beta.reshape(Cout, 1).astype(jnp.float32)

    # Honest VMEM guard for the single-block design (v7x default scoped limit
    # is 32 MiB).  Account for lane padding (last dim -> mult. of 128, second
    # last -> mult. of 8) of the f32 inputs, the in-kernel bf16 copies, and
    # the f32 matmul result / output; x2 slack for temporaries.
    def _pad(r, c, nbytes):
        return ((r + 7) // 8 * 8) * ((c + 127) // 128 * 128) * nbytes

    vmem_bytes = 2 * (
        _pad(Cin, R, 4) + _pad(Cout, Cin, 4)          # f32 inputs
        + _pad(Cin, R, 2) + _pad(Cout, Cin, 2)        # bf16 in-kernel copies
        + 2 * _pad(Cout, R, 4)                        # y + output
        + 2 * _pad(Cout, 1, 4)                        # gamma, beta
    )
    assert vmem_bytes < 24 * 1024 * 1024, (
        "shape too large for the single-block kernel; needs a Cout/R-tiled grid")

    cost = pl.CostEstimate(
        flops=2 * Cout * Cin * R,
        transcendentals=Cout,                          # one rsqrt per channel
        bytes_accessed=(Cin * R * 4 + Cout * Cin * 4   # x, w (f32)
                        + 2 * Cout * 4                 # gamma, beta
                        + Cout * R * 4),               # output
    )

    out2d = pl.pallas_call(
        relu_conv1x1_bn_kernel,
        out_shape=jax.ShapeDtypeStruct((Cout, R), jnp.float32),
        in_specs=[
            pl.BlockSpec(memory_space=pltpu.MemorySpace.VMEM),  # x  (Cin, R)
            pl.BlockSpec(memory_space=pltpu.MemorySpace.VMEM),  # w  (Cout, Cin)
            pl.BlockSpec(memory_space=pltpu.MemorySpace.VMEM),  # gamma
            pl.BlockSpec(memory_space=pltpu.MemorySpace.VMEM),  # beta
        ],
        out_specs=pl.BlockSpec(memory_space=pltpu.MemorySpace.VMEM),
        cost_estimate=cost,
    )(x2d, w2d, gamma2d, beta2d)

    # (Cout, R) is already channel-major: plain (zero-copy) reshape to NCHW.
    return out2d.reshape(1, Cout, H, W)


def _ref_forward(x, weight, gamma, beta):
    """Pure-JAX f32 reference of the PyTorch module (training-mode BN)."""
    xr = jnp.maximum(x, 0.0)
    w2d = weight.reshape(weight.shape[0], -1)
    y = jnp.einsum("oc,nchw->nohw", w2d, xr)
    mean = y.mean(axis=(0, 2, 3), keepdims=True)
    var = ((y - mean) ** 2).mean(axis=(0, 2, 3), keepdims=True)
    yhat = (y - mean) * jax.lax.rsqrt(var + EPS)
    return yhat * gamma.reshape(1, -1, 1, 1) + beta.reshape(1, -1, 1, 1)


if __name__ == "__main__":
    key = jax.random.PRNGKey(0)
    k_x, k_w = jax.random.split(key)

    N, Cin, H, W = 1, 800, 7, 7          # shapes from the module spec
    Cout = 128

    # Deterministic synthetic inputs / parameters (PyTorch-default-style init).
    x = jax.random.normal(k_x, (N, Cin, H, W), dtype=jnp.float32)
    bound = 1.0 / (Cin ** 0.5)           # Conv2d kaiming_uniform bound, fan_in=Cin
    weight = jax.random.uniform(k_w, (Cout, Cin, 1, 1), dtype=jnp.float32,
                                minval=-bound, maxval=bound)
    gamma = jnp.ones((Cout,), dtype=jnp.float32)   # BatchNorm2d default weight
    beta = jnp.zeros((Cout,), dtype=jnp.float32)   # BatchNorm2d default bias

    out = relu_conv1x1_bn(x, weight, gamma, beta)
    jax.block_until_ready(out)

    assert out.shape == (N, Cout, H, W), out.shape
    assert bool(jnp.isfinite(out).all())

    # Sanity check vs the f32 reference (loose tol: kernel uses bf16 MXU
    # operands with f32 accumulation; BN output is ~unit variance).
    ref = _ref_forward(x, weight, gamma, beta)
    max_err = float(jnp.max(jnp.abs(out - ref)))
    assert max_err < 0.15, f"max abs err vs f32 reference: {max_err}"

    print("KERNEL_OK")
</pallas_src>

<mosaic_0001>
module attributes {stable_mosaic.version = 11 : i64} {
  func.func @relu_conv1x1_bn_kernel(%arg0: memref<800x49xf32, #tpu.memory_space<vmem>>, %arg1: memref<128x800xf32, #tpu.memory_space<vmem>>, %arg2: memref<128x1xf32, #tpu.memory_space<vmem>>, %arg3: memref<128x1xf32, #tpu.memory_space<vmem>>, %arg4: memref<128x49xf32, #tpu.memory_space<vmem>>) attributes {dimension_semantics = [], scalar_prefetch = 0 : i64, scratch_operands = 0 : i64, tpu.core_type = #tpu.core_type<tc>} {
    %c0 = arith.constant 0 : index
    %c0_0 = arith.constant 0 : index
    %0 = vector.load %arg0[%c0, %c0_0] : memref<800x49xf32, #tpu.memory_space<vmem>>, vector<800x49xf32>
    %cst = arith.constant 0.000000e+00 : f32
    %1 = vector.broadcast %cst : f32 to vector<800x49xf32>
    %2 = arith.maximumf %0, %1 : vector<800x49xf32>
    %3 = arith.truncf %2 : vector<800x49xf32> to vector<800x49xbf16>
    %c0_1 = arith.constant 0 : index
    %c0_2 = arith.constant 0 : index
    %4 = vector.load %arg1[%c0_1, %c0_2] : memref<128x800xf32, #tpu.memory_space<vmem>>, vector<128x800xf32>
    %5 = arith.truncf %4 : vector<128x800xf32> to vector<128x800xbf16>
    %cst_3 = arith.constant dense<0.000000e+00> : vector<128x49xf32>
    %6 = tpu.matmul %5, %3, %cst_3 {dimension_numbers = #tpu.dot_dimension_numbers<[1], [0], [0], [1], [0, 0, 1, 1], [], []>} : vector<128x800xbf16>, vector<800x49xbf16>, vector<128x49xf32> -> vector<128x49xf32>
    %cst_4 = arith.constant dense<0.000000e+00> : vector<128xf32>
    %7 = vector.multi_reduction <add>, %6, %cst_4 [1] : vector<128x49xf32> to vector<128xf32>
    %8 = vector.shape_cast %7 : vector<128xf32> to vector<128x1xf32>
    %cst_5 = arith.constant 0.0204081628 : f32
    %9 = vector.broadcast %cst_5 : f32 to vector<128x1xf32>
    %10 = arith.mulf %8, %9 : vector<128x1xf32>
    %11 = vector.broadcast %10 : vector<128x1xf32> to vector<128x49xf32>
    %12 = arith.subf %6, %11 : vector<128x49xf32>
    %13 = arith.mulf %12, %12 : vector<128x49xf32>
    %cst_6 = arith.constant dense<0.000000e+00> : vector<128xf32>
    %14 = vector.multi_reduction <add>, %13, %cst_6 [1] : vector<128x49xf32> to vector<128xf32>
    %15 = vector.shape_cast %14 : vector<128xf32> to vector<128x1xf32>
    %cst_7 = arith.constant 0.0204081628 : f32
    %16 = vector.broadcast %cst_7 : f32 to vector<128x1xf32>
    %17 = arith.mulf %15, %16 : vector<128x1xf32>
    %c0_8 = arith.constant 0 : index
    %c0_9 = arith.constant 0 : index
    %18 = vector.load %arg2[%c0_8, %c0_9] : memref<128x1xf32, #tpu.memory_space<vmem>>, vector<128x1xf32>
    %cst_10 = arith.constant 9.99999974E-6 : f32
    %19 = vector.broadcast %cst_10 : f32 to vector<128x1xf32>
    %20 = arith.addf %17, %19 : vector<128x1xf32>
    %21 = math.rsqrt %20 : vector<128x1xf32>
    %22 = arith.mulf %18, %21 : vector<128x1xf32>
    %23 = vector.broadcast %22 : vector<128x1xf32> to vector<128x49xf32>
    %24 = arith.mulf %12, %23 : vector<128x49xf32>
    %c0_11 = arith.constant 0 : index
    %c0_12 = arith.constant 0 : index
    %25 = vector.load %arg3[%c0_11, %c0_12] : memref<128x1xf32, #tpu.memory_space<vmem>>, vector<128x1xf32>
    %26 = vector.broadcast %25 : vector<128x1xf32> to vector<128x49xf32>
    %27 = arith.addf %24, %26 : vector<128x49xf32>
    %c0_13 = arith.constant 0 : index
    %c0_14 = arith.constant 0 : index
    %28 = vector.load %arg4[%c0_13, %c0_14] : memref<128x49xf32, #tpu.memory_space<vmem>>, vector<128x49xf32>
    tpu.vector_store %arg4[%c0_13, %c0_14], %27 {strides = array<i32>} : memref<128x49xf32, #tpu.memory_space<vmem>>, vector<128x49xf32>,
    return
  }
}

</mosaic_0001>

<llo_original>
// kernel: relu_conv1x1_bn.1
$region0: #{relu_conv1x1_bn.1}
  #allocation0 [shape = 'u32[]', space=smem, size = 0x4, offset = 0x4, fixed_abs, tag = 'smem constant byte address 0x4 - core index']
  #allocation1 [shape = 'u32[72,128]{1,0:T(1,128)}', space=vmem, size = 0x9000, scoped, tag = 'internal scratch']
  %s0 = inlined_call_operand.vmem [shape: f32[800,49], index: 0, kind: input, shape index: {}]
  %s1 = inlined_call_operand.vmem [shape: f32[128,800], index: 1, kind: input, shape index: {}]
  %s2 = inlined_call_operand.vmem [shape: f32[128,1], index: 2, kind: input, shape index: {}]
  %s3 = inlined_call_operand.vmem [shape: f32[128,1], index: 3, kind: input, shape index: {}]
  %s4 = inlined_call_operand.vmem [shape: f32[128,49], index: 4, kind: output, shape index: {}]
  %s5 = sld [smem:[#allocation0]]
  $region26: #{relu_conv1x1_bn.1} parent=0
    _
  %s7 = ssub.s32 1, %s5
  %s8 = scalar_select 0, %s7, %s5
  // Predicated region
  $region2: #{relu_conv1x1_bn.1} parent=0 // pred_check
    _
  $region3: #{relu_conv1x1_bn.1} parent=0 // pred_check_branch
    %10 = sbr.rel (0) target = $region5
  $region4: #{relu_conv1x1_bn.1} parent=0 // pred_region
    _
  $region5: #{relu_conv1x1_bn.1} parent=0 // pred_fallthru
    _
  // Predicated region
  $region6: #{relu_conv1x1_bn.1} parent=0 // pred_check
    _
  $region7: #{relu_conv1x1_bn.1} parent=0 // pred_check_branch
    %12 = sbr.rel (0) target = $region9
  $region8: #{relu_conv1x1_bn.1} parent=0 // pred_region
    _
  $region9: #{relu_conv1x1_bn.1} parent=0 // pred_fallthru
    _
  // Predicated region
  $region10: #{relu_conv1x1_bn.1} parent=0 // pred_check
    _
  $region11: #{relu_conv1x1_bn.1} parent=0 // pred_check_branch
    %14 = sbr.rel (0) target = $region13
  $region12: #{relu_conv1x1_bn.1} parent=0 // pred_region
    _
  $region13: #{relu_conv1x1_bn.1} parent=0 // pred_fallthru
    _
  // Predicated region
  $region14: #{relu_conv1x1_bn.1} parent=0 // pred_check
    _
  $region15: #{relu_conv1x1_bn.1} parent=0 // pred_check_branch
    %16 = sbr.rel (0) target = $region17
  $region16: #{relu_conv1x1_bn.1} parent=0 // pred_region
    _
  $region17: #{relu_conv1x1_bn.1} parent=0 // pred_fallthru
    _
  %v18 = vld [vmem:[%s0] sm:$0xff]
  %v19 = vld [vmem:[%s0 + $0x8] sm:$0xff]
  %v20 = vld [vmem:[%s0 + $0x10] sm:$0xff]
  %v21 = vld [vmem:[%s0 + $0x18] sm:$0xff]
  %v22 = vld [vmem:[%s0 + $0x20] sm:$0xff]
  %v23 = vld [vmem:[%s0 + $0x28] sm:$0xff]
  %v24 = vld [vmem:[%s0 + $0x30] sm:$0xff]
  %v25 = vld [vmem:[%s0 + $0x38] sm:$0xff]
  %v26 = vld [vmem:[%s0 + $0x40] sm:$0xff]
  %v27 = vld [vmem:[%s0 + $0x48] sm:$0xff]
  %v28 = vld [vmem:[%s0 + $0x50] sm:$0xff]
  %v29 = vld [vmem:[%s0 + $0x58] sm:$0xff]
  %v30 = vld [vmem:[%s0 + $0x60] sm:$0xff]
  %v31 = vld [vmem:[%s0 + $0x68] sm:$0xff]
  %v32 = vld [vmem:[%s0 + $0x70] sm:$0xff]
  %v33 = vld [vmem:[%s0 + $0x78] sm:$0xff]
  %v34 = vld [vmem:[%s0 + $0x80] sm:$0xff]
  %v35 = vld [vmem:[%s0 + $0x88] sm:$0xff]
  %v36 = vld [vmem:[%s0 + $0x90] sm:$0xff]
  %v37 = vld [vmem:[%s0 + $0x98] sm:$0xff]
  %v38 = vld [vmem:[%s0 + $0xa0] sm:$0xff]
  %v39 = vld [vmem:[%s0 + $0xa8] sm:$0xff]
  %v40 = vld [vmem:[%s0 + $0xb0] sm:$0xff]
  %v41 = vld [vmem:[%s0 + $0xb8] sm:$0xff]
  %v42 = vld [vmem:[%s0 + $0xc0] sm:$0xff]
  %v43 = vld [vmem:[%s0 + $0xc8] sm:$0xff]
  %v44 = vld [vmem:[%s0 + $0xd0] sm:$0xff]
  %v45 = vld [vmem:[%s0 + $0xd8] sm:$0xff]
  %v46 = vld [vmem:[%s0 + $0xe0] sm:$0xff]
  %v47 = vld [vmem:[%s0 + $0xe8] sm:$0xff]
  %v48 = vld [vmem:[%s0 + $0xf0] sm:$0xff]
  %v49 = vld [vmem:[%s0 + $0xf8] sm:$0xff]
  %v50 = vld [vmem:[%s0 + $0x100] sm:$0xff]
  %v51 = vld [vmem:[%s0 + $0x108] sm:$0xff]
  %v52 = vld [vmem:[%s0 + $0x110] sm:$0xff]
  %v53 = vld [vmem:[%s0 + $0x118] sm:$0xff]
  %v54 = vld [vmem:[%s0 + $0x120] sm:$0xff]
  %v55 = vld [vmem:[%s0 + $0x128] sm:$0xff]
  %v56 = vld [vmem:[%s0 + $0x130] sm:$0xff]
  %v57 = vld [vmem:[%s0 + $0x138] sm:$0xff]
  %v58 = vld [vmem:[%s0 + $0x140] sm:$0xff]
  %v59 = vld [vmem:[%s0 + $0x148] sm:$0xff]
  %v60 = vld [vmem:[%s0 + $0x150] sm:$0xff]
  %v61 = vld [vmem:[%s0 + $0x158] sm:$0xff]
  %v62 = vld [vmem:[%s0 + $0x160] sm:$0xff]
  %v63 = vld [vmem:[%s0 + $0x168] sm:$0xff]
  %v64 = vld [vmem:[%s0 + $0x170] sm:$0xff]
  %v65 = vld [vmem:[%s0 + $0x178] sm:$0xff]
  %v66 = vld [vmem:[%s0 + $0x180] sm:$0xff]
  %v67 = vld [vmem:[%s0 + $0x188] sm:$0xff]
  %v68 = vld [vmem:[%s0 + $0x190] sm:$0xff]
  %v69 = vld [vmem:[%s0 + $0x198] sm:$0xff]
  %v70 = vld [vmem:[%s0 + $0x1a0] sm:$0xff]
  %v71 = vld [vmem:[%s0 + $0x1a8] sm:$0xff]
  %v72 = vld [vmem:[%s0 + $0x1b0] sm:$0xff]
  %v73 = vld [vmem:[%s0 + $0x1b8] sm:$0xff]
  %v74 = vld [vmem:[%s0 + $0x1c0] sm:$0xff]
  %v75 = vld [vmem:[%s0 + $0x1c8] sm:$0xff]
  %v76 = vld [vmem:[%s0 + $0x1d0] sm:$0xff]
  %v77 = vld [vmem:[%s0 + $0x1d8] sm:$0xff]
  %v78 = vld [vmem:[%s0 + $0x1e0] sm:$0xff]
  %v79 = vld [vmem:[%s0 + $0x1e8] sm:$0xff]
  %v80 = vld [vmem:[%s0 + $0x1f0] sm:$0xff]
  %v81 = vld [vmem:[%s0 + $0x1f8] sm:$0xff]
  %v82 = vld [vmem:[%s0 + $0x200] sm:$0xff]
  %v83 = vld [vmem:[%s0 + $0x208] sm:$0xff]
  %v84 = vld [vmem:[%s0 + $0x210] sm:$0xff]
  %v85 = vld [vmem:[%s0 + $0x218] sm:$0xff]
  %v86 = vld [vmem:[%s0 + $0x220] sm:$0xff]
  %v87 = vld [vmem:[%s0 + $0x228] sm:$0xff]
  %v88 = vld [vmem:[%s0 + $0x230] sm:$0xff]
  %v89 = vld [vmem:[%s0 + $0x238] sm:$0xff]
  %v90 = vld [vmem:[%s0 + $0x240] sm:$0xff]
  %v91 = vld [vmem:[%s0 + $0x248] sm:$0xff]
  %v92 = vld [vmem:[%s0 + $0x250] sm:$0xff]
  %v93 = vld [vmem:[%s0 + $0x258] sm:$0xff]
  %v94 = vld [vmem:[%s0 + $0x260] sm:$0xff]
  %v95 = vld [vmem:[%s0 + $0x268] sm:$0xff]
  %v96 = vld [vmem:[%s0 + $0x270] sm:$0xff]
  %v97 = vld [vmem:[%s0 + $0x278] sm:$0xff]
  %v98 = vld [vmem:[%s0 + $0x280] sm:$0xff]
  %v99 = vld [vmem:[%s0 + $0x288] sm:$0xff]
  %v100 = vld [vmem:[%s0 + $0x290] sm:$0xff]
  %v101 = vld [vmem:[%s0 + $0x298] sm:$0xff]
  %v102 = vld [vmem:[%s0 + $0x2a0] sm:$0xff]
  %v103 = vld [vmem:[%s0 + $0x2a8] sm:$0xff]
  %v104 = vld [vmem:[%s0 + $0x2b0] sm:$0xff]
  %v105 = vld [vmem:[%s0 + $0x2b8] sm:$0xff]
  %v106 = vld [vmem:[%s0 + $0x2c0] sm:$0xff]
  %v107 = vld [vmem:[%s0 + $0x2c8] sm:$0xff]
  %v108 = vld [vmem:[%s0 + $0x2d0] sm:$0xff]
  %v109 = vld [vmem:[%s0 + $0x2d8] sm:$0xff]
  %v110 = vld [vmem:[%s0 + $0x2e0] sm:$0xff]
  %v111 = vld [vmem:[%s0 + $0x2e8] sm:$0xff]
  %v112 = vld [vmem:[%s0 + $0x2f0] sm:$0xff]
  %v113 = vld [vmem:[%s0 + $0x2f8] sm:$0xff]
  %v114 = vld [vmem:[%s0 + $0x300] sm:$0xff]
  %v115 = vld [vmem:[%s0 + $0x308] sm:$0xff]
  %v116 = vld [vmem:[%s0 + $0x310] sm:$0xff]
  %v117 = vld [vmem:[%s0 + $0x318] sm:$0xff]
  %v118 = vmax.f32 %v18, 0.0
  %v119 = vmax.f32 %v19, 0.0
  %v120 = vmax.f32 %v20, 0.0
  %v121 = vmax.f32 %v21, 0.0
  %v122 = vmax.f32 %v22, 0.0
  %v123 = vmax.f32 %v23, 0.0
  %v124 = vmax.f32 %v24, 0.0
  %v125 = vmax.f32 %v25, 0.0
  %v126 = vmax.f32 %v26, 0.0
  %v127 = vmax.f32 %v27, 0.0
  %v128 = vmax.f32 %v28, 0.0
  %v129 = vmax.f32 %v29, 0.0
  %v130 = vmax.f32 %v30, 0.0
  %v131 = vmax.f32 %v31, 0.0
  %v132 = vmax.f32 %v32, 0.0
  %v133 = vmax.f32 %v33, 0.0
  %v134 = vmax.f32 %v34, 0.0
  %v135 = vmax.f32 %v35, 0.0
  %v136 = vmax.f32 %v36, 0.0
  %v137 = vmax.f32 %v37, 0.0
  %v138 = vmax.f32 %v38, 0.0
  %v139 = vmax.f32 %v39, 0.0
  %v140 = vmax.f32 %v40, 0.0
  %v141 = vmax.f32 %v41, 0.0
  %v142 = vmax.f32 %v42, 0.0
  %v143 = vmax.f32 %v43, 0.0
  %v144 = vmax.f32 %v44, 0.0
  %v145 = vmax.f32 %v45, 0.0
  %v146 = vmax.f32 %v46, 0.0
  %v147 = vmax.f32 %v47, 0.0
  %v148 = vmax.f32 %v48, 0.0
  %v149 = vmax.f32 %v49, 0.0
  %v150 = vmax.f32 %v50, 0.0
  %v151 = vmax.f32 %v51, 0.0
  %v152 = vmax.f32 %v52, 0.0
  %v153 = vmax.f32 %v53, 0.0
  %v154 = vmax.f32 %v54, 0.0
  %v155 = vmax.f32 %v55, 0.0
  %v156 = vmax.f32 %v56, 0.0
  %v157 = vmax.f32 %v57, 0.0
  %v158 = vmax.f32 %v58, 0.0
  %v159 = vmax.f32 %v59, 0.0
  %v160 = vmax.f32 %v60, 0.0
  %v161 = vmax.f32 %v61, 0.0
  %v162 = vmax.f32 %v62, 0.0
  %v163 = vmax.f32 %v63, 0.0
  %v164 = vmax.f32 %v64, 0.0
  %v165 = vmax.f32 %v65, 0.0
  %v166 = vmax.f32 %v66, 0.0
  %v167 = vmax.f32 %v67, 0.0
  %v168 = vmax.f32 %v68, 0.0
  %v169 = vmax.f32 %v69, 0.0
  %v170 = vmax.f32 %v70, 0.0
  %v171 = vmax.f32 %v71, 0.0
  %v172 = vmax.f32 %v72, 0.0
  %v173 = vmax.f32 %v73, 0.0
  %v174 = vmax.f32 %v74, 0.0
  %v175 = vmax.f32 %v75, 0.0
  %v176 = vmax.f32 %v76, 0.0
  %v177 = vmax.f32 %v77, 0.0
  %v178 = vmax.f32 %v78, 0.0
  %v179 = vmax.f32 %v79, 0.0
  %v180 = vmax.f32 %v80, 0.0
  %v181 = vmax.f32 %v81, 0.0
  %v182 = vmax.f32 %v82, 0.0
  %v183 = vmax.f32 %v83, 0.0
  %v184 = vmax.f32 %v84, 0.0
  %v185 = vmax.f32 %v85, 0.0
  %v186 = vmax.f32 %v86, 0.0
  %v187 = vmax.f32 %v87, 0.0
  %v188 = vmax.f32 %v88, 0.0
  %v189 = vmax.f32 %v89, 0.0
  %v190 = vmax.f32 %v90, 0.0
  %v191 = vmax.f32 %v91, 0.0
  %v192 = vmax.f32 %v92, 0.0
  %v193 = vmax.f32 %v93, 0.0
  %v194 = vmax.f32 %v94, 0.0
  %v195 = vmax.f32 %v95, 0.0
  %v196 = vmax.f32 %v96, 0.0
  %v197 = vmax.f32 %v97, 0.0
  %v198 = vmax.f32 %v98, 0.0
  %v199 = vmax.f32 %v99, 0.0
  %v200 = vmax.f32 %v100, 0.0
  %v201 = vmax.f32 %v101, 0.0
  %v202 = vmax.f32 %v102, 0.0
  %v203 = vmax.f32 %v103, 0.0
  %v204 = vmax.f32 %v104, 0.0
  %v205 = vmax.f32 %v105, 0.0
  %v206 = vmax.f32 %v106, 0.0
  %v207 = vmax.f32 %v107, 0.0
  %v208 = vmax.f32 %v108, 0.0
  %v209 = vmax.f32 %v109, 0.0
  %v210 = vmax.f32 %v110, 0.0
  %v211 = vmax.f32 %v111, 0.0
  %v212 = vmax.f32 %v112, 0.0
  %v213 = vmax.f32 %v113, 0.0
  %v214 = vmax.f32 %v114, 0.0
  %v215 = vmax.f32 %v115, 0.0
  %v216 = vmax.f32 %v116, 0.0
  %v217 = vmax.f32 %v117, 0.0
  %v218 = vpack.c.bf16 %v119, %v118
  %v219 = vpack.c.bf16 %v121, %v120
  %v220 = vpack.c.bf16 %v123, %v122
  %v221 = vpack.c.bf16 %v125, %v124
  %v222 = vpack.c.bf16 %v127, %v126
  %v223 = vpack.c.bf16 %v129, %v128
  %v224 = vpack.c.bf16 %v131, %v130
  %v225 = vpack.c.bf16 %v133, %v132
  %v226 = vpack.c.bf16 %v135, %v134
  %v227 = vpack.c.bf16 %v137, %v136
  %v228 = vpack.c.bf16 %v139, %v138
  %v229 = vpack.c.bf16 %v141, %v140
  %v230 = vpack.c.bf16 %v143, %v142
  %v231 = vpack.c.bf16 %v145, %v144
  %v232 = vpack.c.bf16 %v147, %v146
  %v233 = vpack.c.bf16 %v149, %v148
  %v234 = vpack.c.bf16 %v151, %v150
  %v235 = vpack.c.bf16 %v153, %v152
  %v236 = vpack.c.bf16 %v155, %v154
  %v237 = vpack.c.bf16 %v157, %v156
  %v238 = vpack.c.bf16 %v159, %v158
  %v239 = vpack.c.bf16 %v161, %v160
  %v240 = vpack.c.bf16 %v163, %v162
  %v241 = vpack.c.bf16 %v165, %v164
  %v242 = vpack.c.bf16 %v167, %v166
  %v243 = vpack.c.bf16 %v169, %v168
  %v244 = vpack.c.bf16 %v171, %v170
  %v245 = vpack.c.bf16 %v173, %v172
  %v246 = vpack.c.bf16 %v175, %v174
  %v247 = vpack.c.bf16 %v177, %v176
  %v248 = vpack.c.bf16 %v179, %v178
  %v249 = vpack.c.bf16 %v181, %v180
  %v250 = vpack.c.bf16 %v183, %v182
  %v251 = vpack.c.bf16 %v185, %v184
  %v252 = vpack.c.bf16 %v187, %v186
  %v253 = vpack.c.bf16 %v189, %v188
  %v254 = vpack.c.bf16 %v191, %v190
  %v255 = vpack.c.bf16 %v193, %v192
  %v256 = vpack.c.bf16 %v195, %v194
  %v257 = vpack.c.bf16 %v197, %v196
  %v258 = vpack.c.bf16 %v199, %v198
  %v259 = vpack.c.bf16 %v201, %v200
  %v260 = vpack.c.bf16 %v203, %v202
  %v261 = vpack.c.bf16 %v205, %v204
  %v262 = vpack.c.bf16 %v207, %v206
  %v263 = vpack.c.bf16 %v209, %v208
  %v264 = vpack.c.bf16 %v211, %v210
  %v265 = vpack.c.bf16 %v213, %v212
  %v266 = vpack.c.bf16 %v215, %v214
  %v267 = vpack.c.bf16 %v217, %v216
  %v268 = vld [vmem:[%s1] sm:$0xff]
  %v269 = vld [vmem:[%s1 + $0x8] sm:$0xff]
  %v270 = vld [vmem:[%s1 + $0x10] sm:$0xff]
  %v271 = vld [vmem:[%s1 + $0x18] sm:$0xff]
  %v272 = vld [vmem:[%s1 + $0x20] sm:$0xff]
  %v273 = vld [vmem:[%s1 + $0x28] sm:$0xff]
  %v274 = vld [vmem:[%s1 + $0x30] sm:$0xff]
  %v275 = vld [vmem:[%s1 + $0x38] sm:$0xff]
  %v276 = vld [vmem:[%s1 + $0x40] sm:$0xff]
  %v277 = vld [vmem:[%s1 + $0x48] sm:$0xff]
  %v278 = vld [vmem:[%s1 + $0x50] sm:$0xff]
  %v279 = vld [vmem:[%s1 + $0x58] sm:$0xff]
  %v280 = vld [vmem:[%s1 + $0x60] sm:$0xff]
  %v281 = vld [vmem:[%s1 + $0x68] sm:$0xff]
  %v282 = vld [vmem:[%s1 + $0x70] sm:$0xff]
  %v283 = vld [vmem:[%s1 + $0x78] sm:$0xff]
  %v284 = vld [vmem:[%s1 + $0x80] sm:$0xff]
  %v285 = vld [vmem:[%s1 + $0x88] sm:$0xff]
  %v286 = vld [vmem:[%s1 + $0x90] sm:$0xff]
  %v287 = vld [vmem:[%s1 + $0x98] sm:$0xff]
  %v288 = vld [vmem:[%s1 + $0xa0] sm:$0xff]
  %v289 = vld [vmem:[%s1 + $0xa8] sm:$0xff]
  %v290 = vld [vmem:[%s1 + $0xb0] sm:$0xff]
  %v291 = vld [vmem:[%s1 + $0xb8] sm:$0xff]
  %v292 = vld [vmem:[%s1 + $0xc0] sm:$0xff]
  %v293 = vld [vmem:[%s1 + $0xc8] sm:$0xff]
  %v294 = vld [vmem:[%s1 + $0xd0] sm:$0xff]
  %v295 = vld [vmem:[%s1 + $0xd8] sm:$0xff]
  %v296 = vld [vmem:[%s1 + $0xe0] sm:$0xff]
  %v297 = vld [vmem:[%s1 + $0xe8] sm:$0xff]
  %v298 = vld [vmem:[%s1 + $0xf0] sm:$0xff]
  %v299 = vld [vmem:[%s1 + $0xf8] sm:$0xff]
  %v300 = vld [vmem:[%s1 + $0x100] sm:$0xff]
  %v301 = vld [vmem:[%s1 + $0x108] sm:$0xff]
  %v302 = vld [vmem:[%s1 + $0x110] sm:$0xff]
  %v303 = vld [vmem:[%s1 + $0x118] sm:$0xff]
  %v304 = vld [vmem:[%s1 + $0x120] sm:$0xff]
  %v305 = vld [vmem:[%s1 + $0x128] sm:$0xff]
  %v306 = vld [vmem:[%s1 + $0x130] sm:$0xff]
  %v307 = vld [vmem:[%s1 + $0x138] sm:$0xff]
  %v308 = vld [vmem:[%s1 + $0x140] sm:$0xff]
  %v309 = vld [vmem:[%s1 + $0x148] sm:$0xff]
  %v310 = vld [vmem:[%s1 + $0x150] sm:$0xff]
  %v311 = vld [vmem:[%s1 + $0x158] sm:$0xff]
  %v312 = vld [vmem:[%s1 + $0x160] sm:$0xff]
  %v313 = vld [vmem:[%s1 + $0x168] sm:$0xff]
  %v314 = vld [vmem:[%s1 + $0x170] sm:$0xff]
  %v315 = vld [vmem:[%s1 + $0x178] sm:$0xff]
  %v316 = vld [vmem:[%s1 + $0x180] sm:$0xff]
  %v317 = vld [vmem:[%s1 + $0x188] sm:$0xff]
  %v318 = vld [vmem:[%s1 + $0x190] sm:$0xff]
  %v319 = vld [vmem:[%s1 + $0x198] sm:$0xff]
  %v320 = vld [vmem:[%s1 + $0x1a0] sm:$0xff]
  %v321 = vld [vmem:[%s1 + $0x1a8] sm:$0xff]
  %v322 = vld [vmem:[%s1 + $0x1b0] sm:$0xff]
  %v323 = vld [vmem:[%s1 + $0x1b8] sm:$0xff]
  %v324 = vld [vmem:[%s1 + $0x1c0] sm:$0xff]
  %v325 = vld [vmem:[%s1 + $0x1c8] sm:$0xff]
  %v326 = vld [vmem:[%s1 + $0x1d0] sm:$0xff]
  %v327 = vld [vmem:[%s1 + $0x1d8] sm:$0xff]
  %v328 = vld [vmem:[%s1 + $0x1e0] sm:$0xff]
  %v329 = vld [vmem:[%s1 + $0x1e8] sm:$0xff]
  %v330 = vld [vmem:[%s1 + $0x1f0] sm:$0xff]
  %v331 = vld [vmem:[%s1 + $0x1f8] sm:$0xff]
  %v332 = vld [vmem:[%s1 + $0x200] sm:$0xff]
  %v333 = vld [vmem:[%s1 + $0x208] sm:$0xff]
  %v334 = vld [vmem:[%s1 + $0x210] sm:$0xff]
  %v335 = vld [vmem:[%s1 + $0x218] sm:$0xff]
  %v336 = vld [vmem:[%s1 + $0x220] sm:$0xff]
  %v337 = vld [vmem:[%s1 + $0x228] sm:$0xff]
  %v338 = vld [vmem:[%s1 + $0x230] sm:$0xff]
  %v339 = vld [vmem:[%s1 + $0x238] sm:$0xff]
  %v340 = vld [vmem:[%s1 + $0x240] sm:$0xff]
  %v341 = vld [vmem:[%s1 + $0x248] sm:$0xff]
  %v342 = vld [vmem:[%s1 + $0x250] sm:$0xff]
  %v343 = vld [vmem:[%s1 + $0x258] sm:$0xff]
  %v344 = vld [vmem:[%s1 + $0x260] sm:$0xff]
  %v345 = vld [vmem:[%s1 + $0x268] sm:$0xff]
  %v346 = vld [vmem:[%s1 + $0x270] sm:$0xff]
  %v347 = vld [vmem:[%s1 + $0x278] sm:$0xff]
  %v348 = vld [vmem:[%s1 + $0x280] sm:$0xff]
  %v349 = vld [vmem:[%s1 + $0x288] sm:$0xff]
  %v350 = vld [vmem:[%s1 + $0x290] sm:$0xff]
  %v351 = vld [vmem:[%s1 + $0x298] sm:$0xff]
  %v352 = vld [vmem:[%s1 + $0x2a0] sm:$0xff]
  %v353 = vld [vmem:[%s1 + $0x2a8] sm:$0xff]
  %v354 = vld [vmem:[%s1 + $0x2b0] sm:$0xff]
  %v355 = vld [vmem:[%s1 + $0x2b8] sm:$0xff]
  %v356 = vld [vmem:[%s1 + $0x2c0] sm:$0xff]
  %v357 = vld [vmem:[%s1 + $0x2c8] sm:$0xff]
  %v358 = vld [vmem:[%s1 + $0x2d0] sm:$0xff]
  %v359 = vld [vmem:[%s1 + $0x2d8] sm:$0xff]
  %v360 = vld [vmem:[%s1 + $0x2e0] sm:$0xff]
  %v361 = vld [vmem:[%s1 + $0x2e8] sm:$0xff]
  %v362 = vld [vmem:[%s1 + $0x2f0] sm:$0xff]
  %v363 = vld [vmem:[%s1 + $0x2f8] sm:$0xff]
  %v364 = vld [vmem:[%s1 + $0x300] sm:$0xff]
  %v365 = vld [vmem:[%s1 + $0x308] sm:$0xff]
  %v366 = vld [vmem:[%s1 + $0x310] sm:$0xff]
  %v367 = vld [vmem:[%s1 + $0x318] sm:$0xff]
  %v368 = vld [vmem:[%s1 + $0x320] sm:$0xff]
  %v369 = vld [vmem:[%s1 + $0x328] sm:$0xff]
  %v370 = vld [vmem:[%s1 + $0x330] sm:$0xff]
  %v371 = vld [vmem:[%s1 + $0x338] sm:$0xff]
  %v372 = vld [vmem:[%s1 + $0x340] sm:$0xff]
  %v373 = vld [vmem:[%s1 + $0x348] sm:$0xff]
  %v374 = vld [vmem:[%s1 + $0x350] sm:$0xff]
  %v375 = vld [vmem:[%s1 + $0x358] sm:$0xff]
  %v376 = vld [vmem:[%s1 + $0x360] sm:$0xff]
  %v377 = vld [vmem:[%s1 + $0x368] sm:$0xff]
  %v378 = vld [vmem:[%s1 + $0x370] sm:$0xff]
  %v379 = vld [vmem:[%s1 + $0x378] sm:$0xff]
  %v380 = vpack.c.bf16 %v275, %v268
  %v381 = vpack.c.bf16 %v276, %v269
  %v382 = vpack.c.bf16 %v277, %v270
  %v383 = vpack.c.bf16 %v278, %v271
  %v384 = vpack.c.bf16 %v279, %v272
  %v385 = vpack.c.bf16 %v280, %v273
  %v386 = vpack.c.bf16 %v281, %v274
  %v387 = vpack.c.bf16 %v289, %v282
  %v388 = vpack.c.bf16 %v290, %v283
  %v389 = vpack.c.bf16 %v291, %v284
  %v390 = vpack.c.bf16 %v292, %v285
  %v391 = vpack.c.bf16 %v293, %v286
  %v392 = vpack.c.bf16 %v294, %v287
  %v393 = vpack.c.bf16 %v295, %v288
  %v394 = vpack.c.bf16 %v303, %v296
  %v395 = vpack.c.bf16 %v304, %v297
  %v396 = vpack.c.bf16 %v305, %v298
  %v397 = vpack.c.bf16 %v306, %v299
  %v398 = vpack.c.bf16 %v307, %v300
  %v399 = vpack.c.bf16 %v308, %v301
  %v400 = vpack.c.bf16 %v309, %v302
  %v401 = vpack.c.bf16 %v317, %v310
  %v402 = vpack.c.bf16 %v318, %v311
  %v403 = vpack.c.bf16 %v319, %v312
  %v404 = vpack.c.bf16 %v320, %v313
  %v405 = vpack.c.bf16 %v321, %v314
  %v406 = vpack.c.bf16 %v322, %v315
  %v407 = vpack.c.bf16 %v323, %v316
  %v408 = vpack.c.bf16 %v331, %v324
  %v409 = vpack.c.bf16 %v332, %v325
  %v410 = vpack.c.bf16 %v333, %v326
  %v411 = vpack.c.bf16 %v334, %v327
  %v412 = vpack.c.bf16 %v335, %v328
  %v413 = vpack.c.bf16 %v336, %v329
  %v414 = vpack.c.bf16 %v337, %v330
  %v415 = vpack.c.bf16 %v345, %v338
  %v416 = vpack.c.bf16 %v346, %v339
  %v417 = vpack.c.bf16 %v347, %v340
  %v418 = vpack.c.bf16 %v348, %v341
  %v419 = vpack.c.bf16 %v349, %v342
  %v420 = vpack.c.bf16 %v350, %v343
  %v421 = vpack.c.bf16 %v351, %v344
  %v422 = vpack.c.bf16 %v359, %v352
  %v423 = vpack.c.bf16 %v360, %v353
  %v424 = vpack.c.bf16 %v361, %v354
  %v425 = vpack.c.bf16 %v362, %v355
  %v426 = vpack.c.bf16 %v363, %v356
  %v427 = vpack.c.bf16 %v364, %v357
  %v428 = vpack.c.bf16 %v365, %v358
  %v429 = vpack.c.bf16 %v373, %v366
  %v430 = vpack.c.bf16 %v374, %v367
  %v431 = vpack.c.bf16 %v375, %v368
  %v432 = vpack.c.bf16 %v376, %v369
  %v433 = vpack.c.bf16 %v377, %v370
  %v434 = vpack.c.bf16 %v378, %v371
  %v435 = vpack.c.bf16 %v379, %v372
  %vm436 = vcmask 261120
  %v438 = vsel %vm436, %v386, 0
  %v441 = vsel %vm436, %v393, 0
  %v444 = vsel %vm436, %v400, 0
  %v447 = vsel %vm436, %v407, 0
  %v450 = vsel %vm436, %v414, 0
  %v453 = vsel %vm436, %v421, 0
  %v456 = vsel %vm436, %v428, 0
  %v459 = vsel %vm436, %v435, 0
  %461 = vmatpush.bf16.msra.mxu0 %v225
  %462 = vmatpush.bf16.msra.mxu0 %v224
  %463 = vmatpush.bf16.msra.mxu0 %v223
  %464 = vmatpush.bf16.msra.mxu0 %v222
  %465 = vmatpush.bf16.msra.mxu0 %v221
  %466 = vmatpush.bf16.msra.mxu0 %v220
  %467 = vmatpush.bf16.msra.mxu0 %v219
  %468 = vmatpush.bf16.msra.mxu0 %v218
  %469 = vmatmul.bf16.gmra.mxu0 %v380
  %v470 = vpop.f32.mrf.mxu0
  %v471 = vadd.f32 0.0, %v470
  %v472 = vpop.f32.mrf.mxu0
  %v473 = vadd.f32 0.0, %v472
  %474 = vmatmul.bf16.gmra.mxu0 %v387
  %v475 = vpop.f32.mrf.mxu0
  %v476 = vadd.f32 0.0, %v475
  %v477 = vpop.f32.mrf.mxu0
  %v478 = vadd.f32 0.0, %v477
  %479 = vmatmul.bf16.gmra.mxu0 %v394
  %v480 = vpop.f32.mrf.mxu0
  %v481 = vadd.f32 0.0, %v480
  %v482 = vpop.f32.mrf.mxu0
  %v483 = vadd.f32 0.0, %v482
  %484 = vmatmul.bf16.gmra.mxu0 %v401
  %v485 = vpop.f32.mrf.mxu0
  %v486 = vadd.f32 0.0, %v485
  %v487 = vpop.f32.mrf.mxu0
  %v488 = vadd.f32 0.0, %v487
  %489 = vmatmul.bf16.gmra.mxu0 %v408
  %v490 = vpop.f32.mrf.mxu0
  %v491 = vadd.f32 0.0, %v490
  %v492 = vpop.f32.mrf.mxu0
  %v493 = vadd.f32 0.0, %v492
  %494 = vmatmul.bf16.gmra.mxu0 %v415
  %v495 = vpop.f32.mrf.mxu0
  %v496 = vadd.f32 0.0, %v495
  %v497 = vpop.f32.mrf.mxu0
  %v498 = vadd.f32 0.0, %v497
  %499 = vmatmul.bf16.gmra.mxu0 %v422
  %v500 = vpop.f32.mrf.mxu0
  %v501 = vadd.f32 0.0, %v500
  %v502 = vpop.f32.mrf.mxu0
  %v503 = vadd.f32 0.0, %v502
  %504 = vmatmul.bf16.gmra.mxu0 %v429
  %v505 = vpop.f32.mrf.mxu0
  %v506 = vadd.f32 0.0, %v505
  %v507 = vpop.f32.mrf.mxu0
  %v508 = vadd.f32 0.0, %v507
  %509 = vdwg.mxu0
  %510 = vmatpush.bf16.msra.mxu0 %v233
  %511 = vmatpush.bf16.msra.mxu0 %v232
  %512 = vmatpush.bf16.msra.mxu0 %v231
  %513 = vmatpush.bf16.msra.mxu0 %v230
  %514 = vmatpush.bf16.msra.mxu0 %v229
  %515 = vmatpush.bf16.msra.mxu0 %v228
  %516 = vmatpush.bf16.msra.mxu0 %v227
  %517 = vmatpush.bf16.msra.mxu0 %v226
  %518 = vmatmul.bf16.gmra.mxu0 %v381
  %v519 = vpop.f32.mrf.mxu0
  %v520 = vadd.f32 %v471, %v519
  %v521 = vpop.f32.mrf.mxu0
  %v522 = vadd.f32 %v473, %v521
  %523 = vmatmul.bf16.gmra.mxu0 %v388
  %v524 = vpop.f32.mrf.mxu0
  %v525 = vadd.f32 %v476, %v524
  %v526 = vpop.f32.mrf.mxu0
  %v527 = vadd.f32 %v478, %v526
  %528 = vmatmul.bf16.gmra.mxu0 %v395
  %v529 = vpop.f32.mrf.mxu0
  %v530 = vadd.f32 %v481, %v529
  %v531 = vpop.f32.mrf.mxu0
  %v532 = vadd.f32 %v483, %v531
  %533 = vmatmul.bf16.gmra.mxu0 %v402
  %v534 = vpop.f32.mrf.mxu0
  %v535 = vadd.f32 %v486, %v534
  %v536 = vpop.f32.mrf.mxu0
  %v537 = vadd.f32 %v488, %v536
  %538 = vmatmul.bf16.gmra.mxu0 %v409
  %v539 = vpop.f32.mrf.mxu0
  %v540 = vadd.f32 %v491, %v539
  %v541 = vpop.f32.mrf.mxu0
  %v542 = vadd.f32 %v493, %v541
  %543 = vmatmul.bf16.gmra.mxu0 %v416
  %v544 = vpop.f32.mrf.mxu0
  %v545 = vadd.f32 %v496, %v544
  %v546 = vpop.f32.mrf.mxu0
  %v547 = vadd.f32 %v498, %v546
  %548 = vmatmul.bf16.gmra.mxu0 %v423
  %v549 = vpop.f32.mrf.mxu0
  %v550 = vadd.f32 %v501, %v549
  %v551 = vpop.f32.mrf.mxu0
  %v552 = vadd.f32 %v503, %v551
  %553 = vmatmul.bf16.gmra.mxu0 %v430
  %v554 = vpop.f32.mrf.mxu0
  %v555 = vadd.f32 %v506, %v554
  %v556 = vpop.f32.mrf.mxu0
  %v557 = vadd.f32 %v508, %v556
  %558 = vdwg.mxu0
  %559 = vmatpush.bf16.msra.mxu0 %v241
  %560 = vmatpush.bf16.msra.mxu0 %v240
  %561 = vmatpush.bf16.msra.mxu0 %v239
  %562 = vmatpush.bf16.msra.mxu0 %v238
  %563 = vmatpush.bf16.msra.mxu0 %v237
  %564 = vmatpush.bf16.msra.mxu0 %v236
  %565 = vmatpush.bf16.msra.mxu0 %v235
  %566 = vmatpush.bf16.msra.mxu0 %v234
  %567 = vmatmul.bf16.gmra.mxu0 %v382
  %v568 = vpop.f32.mrf.mxu0
  %v569 = vadd.f32 %v520, %v568
  %v570 = vpop.f32.mrf.mxu0
  %v571 = vadd.f32 %v522, %v570
  %572 = vmatmul.bf16.gmra.mxu0 %v389
  %v573 = vpop.f32.mrf.mxu0
  %v574 = vadd.f32 %v525, %v573
  %v575 = vpop.f32.mrf.mxu0
  %v576 = vadd.f32 %v527, %v575
  %577 = vmatmul.bf16.gmra.mxu0 %v396
  %v578 = vpop.f32.mrf.mxu0
  %v579 = vadd.f32 %v530, %v578
  %v580 = vpop.f32.mrf.mxu0
  %v581 = vadd.f32 %v532, %v580
  %582 = vmatmul.bf16.gmra.mxu0 %v403
  %v583 = vpop.f32.mrf.mxu0
  %v584 = vadd.f32 %v535, %v583
  %v585 = vpop.f32.mrf.mxu0
  %v586 = vadd.f32 %v537, %v585
  %587 = vmatmul.bf16.gmra.mxu0 %v410
  %v588 = vpop.f32.mrf.mxu0
  %v589 = vadd.f32 %v540, %v588
  %v590 = vpop.f32.mrf.mxu0
  %v591 = vadd.f32 %v542, %v590
  %592 = vmatmul.bf16.gmra.mxu0 %v417
  %v593 = vpop.f32.mrf.mxu0
  %v594 = vadd.f32 %v545, %v593
  %v595 = vpop.f32.mrf.mxu0
  %v596 = vadd.f32 %v547, %v595
  %597 = vmatmul.bf16.gmra.mxu0 %v424
  %v598 = vpop.f32.mrf.mxu0
  %v599 = vadd.f32 %v550, %v598
  %v600 = vpop.f32.mrf.mxu0
  %v601 = vadd.f32 %v552, %v600
  %602 = vmatmul.bf16.gmra.mxu0 %v431
  %v603 = vpop.f32.mrf.mxu0
  %v604 = vadd.f32 %v555, %v603
  %v605 = vpop.f32.mrf.mxu0
  %v606 = vadd.f32 %v557, %v605
  %607 = vdwg.mxu0
  %608 = vmatpush.bf16.msra.mxu0 %v249
  %609 = vmatpush.bf16.msra.mxu0 %v248
  %610 = vmatpush.bf16.msra.mxu0 %v247
  %611 = vmatpush.bf16.msra.mxu0 %v246
  %612 = vmatpush.bf16.msra.mxu0 %v245
  %613 = vmatpush.bf16.msra.mxu0 %v244
  %614 = vmatpush.bf16.msra.mxu0 %v243
  %615 = vmatpush.bf16.msra.mxu0 %v242
  %616 = vmatmul.bf16.gmra.mxu0 %v383
  %v617 = vpop.f32.mrf.mxu0
  %v618 = vadd.f32 %v569, %v617
  %v619 = vpop.f32.mrf.mxu0
  %v620 = vadd.f32 %v571, %v619
  %621 = vmatmul.bf16.gmra.mxu0 %v390
  %v622 = vpop.f32.mrf.mxu0
  %v623 = vadd.f32 %v574, %v622
  %v624 = vpop.f32.mrf.mxu0
  %v625 = vadd.f32 %v576, %v624
  %626 = vmatmul.bf16.gmra.mxu0 %v397
  %v627 = vpop.f32.mrf.mxu0
  %v628 = vadd.f32 %v579, %v627
  %v629 = vpop.f32.mrf.mxu0
  %v630 = vadd.f32 %v581, %v629
  %631 = vmatmul.bf16.gmra.mxu0 %v404
  %v632 = vpop.f32.mrf.mxu0
  %v633 = vadd.f32 %v584, %v632
  %v634 = vpop.f32.mrf.mxu0
  %v635 = vadd.f32 %v586, %v634
  %636 = vmatmul.bf16.gmra.mxu0 %v411
  %v637 = vpop.f32.mrf.mxu0
  %v638 = vadd.f32 %v589, %v637
  %v639 = vpop.f32.mrf.mxu0
  %v640 = vadd.f32 %v591, %v639
  %641 = vmatmul.bf16.gmra.mxu0 %v418
  %v642 = vpop.f32.mrf.mxu0
  %v643 = vadd.f32 %v594, %v642
  %v644 = vpop.f32.mrf.mxu0
  %v645 = vadd.f32 %v596, %v644
  %646 = vmatmul.bf16.gmra.mxu0 %v425
  %v647 = vpop.f32.mrf.mxu0
  %v648 = vadd.f32 %v599, %v647
  %v649 = vpop.f32.mrf.mxu0
  %v650 = vadd.f32 %v601, %v649
  %651 = vmatmul.bf16.gmra.mxu0 %v432
  %v652 = vpop.f32.mrf.mxu0
  %v653 = vadd.f32 %v604, %v652
  %v654 = vpop.f32.mrf.mxu0
  %v655 = vadd.f32 %v606, %v654
  %656 = vdwg.mxu0
  %657 = vmatpush.bf16.msra.mxu0 %v257
  %658 = vmatpush.bf16.msra.mxu0 %v256
  %659 = vmatpush.bf16.msra.mxu0 %v255
  %660 = vmatpush.bf16.msra.mxu0 %v254
  %661 = vmatpush.bf16.msra.mxu0 %v253
  %662 = vmatpush.bf16.msra.mxu0 %v252
  %663 = vmatpush.bf16.msra.mxu0 %v251
  %664 = vmatpush.bf16.msra.mxu0 %v250
  %665 = vmatmul.bf16.gmra.mxu0 %v384
  %v666 = vpop.f32.mrf.mxu0
  %v667 = vadd.f32 %v618, %v666
  %v668 = vpop.f32.mrf.mxu0
  %v669 = vadd.f32 %v620, %v668
  %670 = vmatmul.bf16.gmra.mxu0 %v391
  %v671 = vpop.f32.mrf.mxu0
  %v672 = vadd.f32 %v623, %v671
  %v673 = vpop.f32.mrf.mxu0
  %v674 = vadd.f32 %v625, %v673
  %675 = vmatmul.bf16.gmra.mxu0 %v398
  %v676 = vpop.f32.mrf.mxu0
  %v677 = vadd.f32 %v628, %v676
  %v678 = vpop.f32.mrf.mxu0
  %v679 = vadd.f32 %v630, %v678
  %680 = vmatmul.bf16.gmra.mxu0 %v405
  %v681 = vpop.f32.mrf.mxu0
  %v682 = vadd.f32 %v633, %v681
  %v683 = vpop.f32.mrf.mxu0
  %v684 = vadd.f32 %v635, %v683
  %685 = vmatmul.bf16.gmra.mxu0 %v412
  %v686 = vpop.f32.mrf.mxu0
  %v687 = vadd.f32 %v638, %v686
  %v688 = vpop.f32.mrf.mxu0
  %v689 = vadd.f32 %v640, %v688
  %690 = vmatmul.bf16.gmra.mxu0 %v419
  %v691 = vpop.f32.mrf.mxu0
  %v692 = vadd.f32 %v643, %v691
  %v693 = vpop.f32.mrf.mxu0
  %v694 = vadd.f32 %v645, %v693
  %695 = vmatmul.bf16.gmra.mxu0 %v426
  %v696 = vpop.f32.mrf.mxu0
  %v697 = vadd.f32 %v648, %v696
  %v698 = vpop.f32.mrf.mxu0
  %v699 = vadd.f32 %v650, %v698
  %700 = vmatmul.bf16.gmra.mxu0 %v433
  %v701 = vpop.f32.mrf.mxu0
  %v702 = vadd.f32 %v653, %v701
  %v703 = vpop.f32.mrf.mxu0
  %v704 = vadd.f32 %v655, %v703
  %705 = vdwg.mxu0
  %706 = vmatpush.bf16.msra.mxu0 %v265
  %707 = vmatpush.bf16.msra.mxu0 %v264
  %708 = vmatpush.bf16.msra.mxu0 %v263
  %709 = vmatpush.bf16.msra.mxu0 %v262
  %710 = vmatpush.bf16.msra.mxu0 %v261
  %711 = vmatpush.bf16.msra.mxu0 %v260
  %712 = vmatpush.bf16.msra.mxu0 %v259
  %713 = vmatpush.bf16.msra.mxu0 %v258
  %714 = vmatmul.bf16.gmra.mxu0 %v385
  %v715 = vpop.f32.mrf.mxu0
  %v716 = vadd.f32 %v667, %v715
  %v717 = vpop.f32.mrf.mxu0
  %v718 = vadd.f32 %v669, %v717
  %719 = vmatmul.bf16.gmra.mxu0 %v392
  %v720 = vpop.f32.mrf.mxu0
  %v721 = vadd.f32 %v672, %v720
  %v722 = vpop.f32.mrf.mxu0
  %v723 = vadd.f32 %v674, %v722
  %724 = vmatmul.bf16.gmra.mxu0 %v399
  %v725 = vpop.f32.mrf.mxu0
  %v726 = vadd.f32 %v677, %v725
  %v727 = vpop.f32.mrf.mxu0
  %v728 = vadd.f32 %v679, %v727
  %729 = vmatmul.bf16.gmra.mxu0 %v406
  %v730 = vpop.f32.mrf.mxu0
  %v731 = vadd.f32 %v682, %v730
  %v732 = vpop.f32.mrf.mxu0
  %v733 = vadd.f32 %v684, %v732
  %734 = vmatmul.bf16.gmra.mxu0 %v413
  %v735 = vpop.f32.mrf.mxu0
  %v736 = vadd.f32 %v687, %v735
  %v737 = vpop.f32.mrf.mxu0
  %v738 = vadd.f32 %v689, %v737
  %739 = vmatmul.bf16.gmra.mxu0 %v420
  %v740 = vpop.f32.mrf.mxu0
  %v741 = vadd.f32 %v692, %v740
  %v742 = vpop.f32.mrf.mxu0
  %v743 = vadd.f32 %v694, %v742
  %744 = vmatmul.bf16.gmra.mxu0 %v427
  %v745 = vpop.f32.mrf.mxu0
  %v746 = vadd.f32 %v697, %v745
  %v747 = vpop.f32.mrf.mxu0
  %v748 = vadd.f32 %v699, %v747
  %749 = vmatmul.bf16.gmra.mxu0 %v434
  %v750 = vpop.f32.mrf.mxu0
  %v751 = vadd.f32 %v702, %v750
  %v752 = vpop.f32.mrf.mxu0
  %v753 = vadd.f32 %v704, %v752
  %754 = vdwg.mxu0
  %755 = vmatpush.bf16.msra.mxu0 0
  %756 = vmatpush.bf16.msra.mxu0 0
  %757 = vmatpush.bf16.msra.mxu0 0
  %758 = vmatpush.bf16.msra.mxu0 0
  %759 = vmatpush.bf16.msra.mxu0 0
  %760 = vmatpush.bf16.msra.mxu0 0
  %761 = vmatpush.bf16.msra.mxu0 %v267
  %762 = vmatpush.bf16.msra.mxu0 %v266
  %763 = vmatmul.bf16.gmra.mxu0 %v438
  %v764 = vpop.f32.mrf.mxu0
  %v765 = vadd.f32 %v716, %v764
  %v766 = vpop.f32.mrf.mxu0
  %v767 = vadd.f32 %v718, %v766
  %768 = vmatmul.bf16.gmra.mxu0 %v441
  %v769 = vpop.f32.mrf.mxu0
  %v770 = vadd.f32 %v721, %v769
  %v771 = vpop.f32.mrf.mxu0
  %v772 = vadd.f32 %v723, %v771
  %773 = vmatmul.bf16.gmra.mxu0 %v444
  %v774 = vpop.f32.mrf.mxu0
  %v775 = vadd.f32 %v726, %v774
  %v776 = vpop.f32.mrf.mxu0
  %v777 = vadd.f32 %v728, %v776
  %778 = vmatmul.bf16.gmra.mxu0 %v447
  %v779 = vpop.f32.mrf.mxu0
  %v780 = vadd.f32 %v731, %v779
  %v781 = vpop.f32.mrf.mxu0
  %v782 = vadd.f32 %v733, %v781
  %783 = vmatmul.bf16.gmra.mxu0 %v450
  %v784 = vpop.f32.mrf.mxu0
  %v785 = vadd.f32 %v736, %v784
  %v786 = vpop.f32.mrf.mxu0
  %v787 = vadd.f32 %v738, %v786
  %788 = vmatmul.bf16.gmra.mxu0 %v453
  %v789 = vpop.f32.mrf.mxu0
  %v790 = vadd.f32 %v741, %v789
  %v791 = vpop.f32.mrf.mxu0
  %v792 = vadd.f32 %v743, %v791
  %793 = vmatmul.bf16.gmra.mxu0 %v456
  %v794 = vpop.f32.mrf.mxu0
  %v795 = vadd.f32 %v746, %v794
  %v796 = vpop.f32.mrf.mxu0
  %v797 = vadd.f32 %v748, %v796
  %798 = vmatmul.bf16.gmra.mxu0 %v459
  %v799 = vpop.f32.mrf.mxu0
  %v800 = vadd.f32 %v751, %v799
  %v801 = vpop.f32.mrf.mxu0
  %v802 = vadd.f32 %v753, %v801
  %803 = vdwg.mxu0
  %vm804 = vcmask 400384
  %v805 = vsel %vm804, %v765, 0.0
  %806 = vadd.xlane.f32.xlu0 %v805
  %v807 = vpop.xlane.xlu0 %806
  %v808 = vsel %vm804, %v767, 0.0
  %809 = vadd.xlane.f32.xlu0 %v808
  %v810 = vpop.xlane.xlu0 %809
  %v811 = vsel %vm804, %v770, 0.0
  %812 = vadd.xlane.f32.xlu0 %v811
  %v813 = vpop.xlane.xlu0 %812
  %v814 = vsel %vm804, %v772, 0.0
  %815 = vadd.xlane.f32.xlu0 %v814
  %v816 = vpop.xlane.xlu0 %815
  %v817 = vsel %vm804, %v775, 0.0
  %818 = vadd.xlane.f32.xlu0 %v817
  %v819 = vpop.xlane.xlu0 %818
  %v820 = vsel %vm804, %v777, 0.0
  %821 = vadd.xlane.f32.xlu0 %v820
  %v822 = vpop.xlane.xlu0 %821
  %v823 = vsel %vm804, %v780, 0.0
  %824 = vadd.xlane.f32.xlu0 %v823
  %v825 = vpop.xlane.xlu0 %824
  %v826 = vsel %vm804, %v782, 0.0
  %827 = vadd.xlane.f32.xlu0 %v826
  %v828 = vpop.xlane.xlu0 %827
  %v829 = vsel %vm804, %v785, 0.0
  %830 = vadd.xlane.f32.xlu0 %v829
  %v831 = vpop.xlane.xlu0 %830
  %v832 = vsel %vm804, %v787, 0.0
  %833 = vadd.xlane.f32.xlu0 %v832
  %v834 = vpop.xlane.xlu0 %833
  %v835 = vsel %vm804, %v790, 0.0
  %836 = vadd.xlane.f32.xlu0 %v835
  %v837 = vpop.xlane.xlu0 %836
  %v838 = vsel %vm804, %v792, 0.0
  %839 = vadd.xlane.f32.xlu0 %v838
  %v840 = vpop.xlane.xlu0 %839
  %v841 = vsel %vm804, %v795, 0.0
  %842 = vadd.xlane.f32.xlu0 %v841
  %v843 = vpop.xlane.xlu0 %842
  %v844 = vsel %vm804, %v797, 0.0
  %845 = vadd.xlane.f32.xlu0 %v844
  %v846 = vpop.xlane.xlu0 %845
  %v847 = vsel %vm804, %v800, 0.0
  %848 = vadd.xlane.f32.xlu0 %v847
  %v849 = vpop.xlane.xlu0 %848
  %v850 = vsel %vm804, %v802, 0.0
  %851 = vadd.xlane.f32.xlu0 %v850
  %v852 = vpop.xlane.xlu0 %851
  %v853 = vmul.f32 %v807, 0.020408163
  %v854 = vmul.f32 %v810, 0.020408163
  %v855 = vmul.f32 %v813, 0.020408163
  %v856 = vmul.f32 %v816, 0.020408163
  %v857 = vmul.f32 %v819, 0.020408163
  %v858 = vmul.f32 %v822, 0.020408163
  %v859 = vmul.f32 %v825, 0.020408163
  %v860 = vmul.f32 %v828, 0.020408163
  %v861 = vmul.f32 %v831, 0.020408163
  %v862 = vmul.f32 %v834, 0.020408163
  %v863 = vmul.f32 %v837, 0.020408163
  %v864 = vmul.f32 %v840, 0.020408163
  %v865 = vmul.f32 %v843, 0.020408163
  %v866 = vmul.f32 %v846, 0.020408163
  %v867 = vmul.f32 %v849, 0.020408163
  %v868 = vmul.f32 %v852, 0.020408163
  %v869 = vsub.f32 %v765, %v853
  %v870 = vsub.f32 %v767, %v854
  %v871 = vsub.f32 %v770, %v855
  %v872 = vsub.f32 %v772, %v856
  %v873 = vsub.f32 %v775, %v857
  %v874 = vsub.f32 %v777, %v858
  %v875 = vsub.f32 %v780, %v859
  %v876 = vsub.f32 %v782, %v860
  %v877 = vsub.f32 %v785, %v861
  %v878 = vsub.f32 %v787, %v862
  %v879 = vsub.f32 %v790, %v863
  %v880 = vsub.f32 %v792, %v864
  %v881 = vsub.f32 %v795, %v865
  %v882 = vsub.f32 %v797, %v866
  %v883 = vsub.f32 %v800, %v867
  %v884 = vsub.f32 %v802, %v868
  %v885 = vmul.f32 %v869, %v869
  %v886 = vmul.f32 %v870, %v870
  %v887 = vmul.f32 %v871, %v871
  %v888 = vmul.f32 %v872, %v872
  %v889 = vmul.f32 %v873, %v873
  %v890 = vmul.f32 %v874, %v874
  %v891 = vmul.f32 %v875, %v875
  %v892 = vmul.f32 %v876, %v876
  %v893 = vmul.f32 %v877, %v877
  %v894 = vmul.f32 %v878, %v878
  %v895 = vmul.f32 %v879, %v879
  %v896 = vmul.f32 %v880, %v880
  %v897 = vmul.f32 %v881, %v881
  %v898 = vmul.f32 %v882, %v882
  %v899 = vmul.f32 %v883, %v883
  %v900 = vmul.f32 %v884, %v884
  %v901 = vsel %vm804, %v885, 0.0
  %902 = vadd.xlane.f32.xlu0 %v901
  %v903 = vpop.xlane.xlu0 %902
  %v904 = vsel %vm804, %v886, 0.0
  %905 = vadd.xlane.f32.xlu0 %v904
  %v906 = vpop.xlane.xlu0 %905
  %v907 = vsel %vm804, %v887, 0.0
  %908 = vadd.xlane.f32.xlu0 %v907
  %v909 = vpop.xlane.xlu0 %908
  %v910 = vsel %vm804, %v888, 0.0
  %911 = vadd.xlane.f32.xlu0 %v910
  %v912 = vpop.xlane.xlu0 %911
  %v913 = vsel %vm804, %v889, 0.0
  %914 = vadd.xlane.f32.xlu0 %v913
  %v915 = vpop.xlane.xlu0 %914
  %v916 = vsel %vm804, %v890, 0.0
  %917 = vadd.xlane.f32.xlu0 %v916
  %v918 = vpop.xlane.xlu0 %917
  %v919 = vsel %vm804, %v891, 0.0
  %920 = vadd.xlane.f32.xlu0 %v919
  %v921 = vpop.xlane.xlu0 %920
  %v922 = vsel %vm804, %v892, 0.0
  %923 = vadd.xlane.f32.xlu0 %v922
  %v924 = vpop.xlane.xlu0 %923
  %v925 = vsel %vm804, %v893, 0.0
  %926 = vadd.xlane.f32.xlu0 %v925
  %v927 = vpop.xlane.xlu0 %926
  %v928 = vsel %vm804, %v894, 0.0
  %929 = vadd.xlane.f32.xlu0 %v928
  %v930 = vpop.xlane.xlu0 %929
  %v931 = vsel %vm804, %v895, 0.0
  %932 = vadd.xlane.f32.xlu0 %v931
  %v933 = vpop.xlane.xlu0 %932
  %v934 = vsel %vm804, %v896, 0.0
  %935 = vadd.xlane.f32.xlu0 %v934
  %v936 = vpop.xlane.xlu0 %935
  %v937 = vsel %vm804, %v897, 0.0
  %938 = vadd.xlane.f32.xlu0 %v937
  %v939 = vpop.xlane.xlu0 %938
  %v940 = vsel %vm804, %v898, 0.0
  %941 = vadd.xlane.f32.xlu0 %v940
  %v942 = vpop.xlane.xlu0 %941
  %v943 = vsel %vm804, %v899, 0.0
  %944 = vadd.xlane.f32.xlu0 %v943
  %v945 = vpop.xlane.xlu0 %944
  %v946 = vsel %vm804, %v900, 0.0
  %947 = vadd.xlane.f32.xlu0 %v946
  %v948 = vpop.xlane.xlu0 %947
  %v949 = vmul.f32 %v903, 0.020408163
  %v950 = vmul.f32 %v906, 0.020408163
  %v951 = vmul.f32 %v909, 0.020408163
  %v952 = vmul.f32 %v912, 0.020408163
  %v953 = vmul.f32 %v915, 0.020408163
  %v954 = vmul.f32 %v918, 0.020408163
  %v955 = vmul.f32 %v921, 0.020408163
  %v956 = vmul.f32 %v924, 0.020408163
  %v957 = vmul.f32 %v927, 0.020408163
  %v958 = vmul.f32 %v930, 0.020408163
  %v959 = vmul.f32 %v933, 0.020408163
  %v960 = vmul.f32 %v936, 0.020408163
  %v961 = vmul.f32 %v939, 0.020408163
  %v962 = vmul.f32 %v942, 0.020408163
  %v963 = vmul.f32 %v945, 0.020408163
  %v964 = vmul.f32 %v948, 0.020408163
  %v965 = vld [vmem:[%s2] sm:$0xff]
  %v966 = vld [vmem:[%s2 + $0x8] sm:$0xff]
  %v967 = vld [vmem:[%s2 + $0x10] sm:$0xff]
  %v968 = vld [vmem:[%s2 + $0x18] sm:$0xff]
  %v969 = vld [vmem:[%s2 + $0x20] sm:$0xff]
  %v970 = vld [vmem:[%s2 + $0x28] sm:$0xff]
  %v971 = vld [vmem:[%s2 + $0x30] sm:$0xff]
  %v972 = vld [vmem:[%s2 + $0x38] sm:$0xff]
  %v973 = vld [vmem:[%s2 + $0x40] sm:$0xff]
  %v974 = vld [vmem:[%s2 + $0x48] sm:$0xff]
  %v975 = vld [vmem:[%s2 + $0x50] sm:$0xff]
  %v976 = vld [vmem:[%s2 + $0x58] sm:$0xff]
  %v977 = vld [vmem:[%s2 + $0x60] sm:$0xff]
  %v978 = vld [vmem:[%s2 + $0x68] sm:$0xff]
  %v979 = vld [vmem:[%s2 + $0x70] sm:$0xff]
  %v980 = vld [vmem:[%s2 + $0x78] sm:$0xff]
  %v981 = vadd.f32 %v949, 1e-05
  %v982 = vadd.f32 %v950, 1e-05
  %v983 = vadd.f32 %v951, 1e-05
  %v984 = vadd.f32 %v952, 1e-05
  %v985 = vadd.f32 %v953, 1e-05
  %v986 = vadd.f32 %v954, 1e-05
  %v987 = vadd.f32 %v955, 1e-05
  %v988 = vadd.f32 %v956, 1e-05
  %v989 = vadd.f32 %v957, 1e-05
  %v990 = vadd.f32 %v958, 1e-05
  %v991 = vadd.f32 %v959, 1e-05
  %v992 = vadd.f32 %v960, 1e-05
  %v993 = vadd.f32 %v961, 1e-05
  %v994 = vadd.f32 %v962, 1e-05
  %v995 = vadd.f32 %v963, 1e-05
  %v996 = vadd.f32 %v964, 1e-05
  %v997 = vrsqrt.pop %v981
  %v998 = vmul.f32 %v997, %v981
  %v999 = vmul.f32 %v998, %v997
  %v1000 = vmul.f32 0.5, %v999
  %v1001 = vsub.f32 1.5, %v1000
  %v1002 = vmul.f32 %v997, %v1001
  %vm1003 = vweird.f32 %v981
  %vm1004 = vweird.f32 %v997
  %vm1005 = vmor %vm1003, %vm1004
  %v1006 = vsel %vm1005, %v997, %v1002
  %v1007 = vrsqrt.pop %v982
  %v1008 = vmul.f32 %v1007, %v982
  %v1009 = vmul.f32 %v1008, %v1007
  %v1010 = vmul.f32 0.5, %v1009
  %v1011 = vsub.f32 1.5, %v1010
  %v1012 = vmul.f32 %v1007, %v1011
  %vm1013 = vweird.f32 %v982
  %vm1014 = vweird.f32 %v1007
  %vm1015 = vmor %vm1013, %vm1014
  %v1016 = vsel %vm1015, %v1007, %v1012
  %v1017 = vrsqrt.pop %v983
  %v1018 = vmul.f32 %v1017, %v983
  %v1019 = vmul.f32 %v1018, %v1017
  %v1020 = vmul.f32 0.5, %v1019
  %v1021 = vsub.f32 1.5, %v1020
  %v1022 = vmul.f32 %v1017, %v1021
  %vm1023 = vweird.f32 %v983
  %vm1024 = vweird.f32 %v1017
  %vm1025 = vmor %vm1023, %vm1024
  %v1026 = vsel %vm1025, %v1017, %v1022
  %v1027 = vrsqrt.pop %v984
  %v1028 = vmul.f32 %v1027, %v984
  %v1029 = vmul.f32 %v1028, %v1027
  %v1030 = vmul.f32 0.5, %v1029
  %v1031 = vsub.f32 1.5, %v1030
  %v1032 = vmul.f32 %v1027, %v1031
  %vm1033 = vweird.f32 %v984
  %vm1034 = vweird.f32 %v1027
  %vm1035 = vmor %vm1033, %vm1034
  %v1036 = vsel %vm1035, %v1027, %v1032
  %v1037 = vrsqrt.pop %v985
  %v1038 = vmul.f32 %v1037, %v985
  %v1039 = vmul.f32 %v1038, %v1037
  %v1040 = vmul.f32 0.5, %v1039
  %v1041 = vsub.f32 1.5, %v1040
  %v1042 = vmul.f32 %v1037, %v1041
  %vm1043 = vweird.f32 %v985
  %vm1044 = vweird.f32 %v1037
  %vm1045 = vmor %vm1043, %vm1044
  %v1046 = vsel %vm1045, %v1037, %v1042
  %v1047 = vrsqrt.pop %v986
  %v1048 = vmul.f32 %v1047, %v986
  %v1049 = vmul.f32 %v1048, %v1047
  %v1050 = vmul.f32 0.5, %v1049
  %v1051 = vsub.f32 1.5, %v1050
  %v1052 = vmul.f32 %v1047, %v1051
  %vm1053 = vweird.f32 %v986
  %vm1054 = vweird.f32 %v1047
  %vm1055 = vmor %vm1053, %vm1054
  %v1056 = vsel %vm1055, %v1047, %v1052
  %v1057 = vrsqrt.pop %v987
  %v1058 = vmul.f32 %v1057, %v987
  %v1059 = vmul.f32 %v1058, %v1057
  %v1060 = vmul.f32 0.5, %v1059
  %v1061 = vsub.f32 1.5, %v1060
  %v1062 = vmul.f32 %v1057, %v1061
  %vm1063 = vweird.f32 %v987
  %vm1064 = vweird.f32 %v1057
  %vm1065 = vmor %vm1063, %vm1064
  %v1066 = vsel %vm1065, %v1057, %v1062
  %v1067 = vrsqrt.pop %v988
  %v1068 = vmul.f32 %v1067, %v988
  %v1069 = vmul.f32 %v1068, %v1067
  %v1070 = vmul.f32 0.5, %v1069
  %v1071 = vsub.f32 1.5, %v1070
  %v1072 = vmul.f32 %v1067, %v1071
  %vm1073 = vweird.f32 %v988
  %vm1074 = vweird.f32 %v1067
  %vm1075 = vmor %vm1073, %vm1074
  %v1076 = vsel %vm1075, %v1067, %v1072
  %v1077 = vrsqrt.pop %v989
  %v1078 = vmul.f32 %v1077, %v989
  %v1079 = vmul.f32 %v1078, %v1077
  %v1080 = vmul.f32 0.5, %v1079
  %v1081 = vsub.f32 1.5, %v1080
  %v1082 = vmul.f32 %v1077, %v1081
  %vm1083 = vweird.f32 %v989
  %vm1084 = vweird.f32 %v1077
  %vm1085 = vmor %vm1083, %vm1084
  %v1086 = vsel %vm1085, %v1077, %v1082
  %v1087 = vrsqrt.pop %v990
  %v1088 = vmul.f32 %v1087, %v990
  %v1089 = vmul.f32 %v1088, %v1087
  %v1090 = vmul.f32 0.5, %v1089
  %v1091 = vsub.f32 1.5, %v1090
  %v1092 = vmul.f32 %v1087, %v1091
  %vm1093 = vweird.f32 %v990
  %vm1094 = vweird.f32 %v1087
  %vm1095 = vmor %vm1093, %vm1094
  %v1096 = vsel %vm1095, %v1087, %v1092
  %v1097 = vrsqrt.pop %v991
  %v1098 = vmul.f32 %v1097, %v991
  %v1099 = vmul.f32 %v1098, %v1097
  %v1100 = vmul.f32 0.5, %v1099
  %v1101 = vsub.f32 1.5, %v1100
  %v1102 = vmul.f32 %v1097, %v1101
  %vm1103 = vweird.f32 %v991
  %vm1104 = vweird.f32 %v1097
  %vm1105 = vmor %vm1103, %vm1104
  %v1106 = vsel %vm1105, %v1097, %v1102
  %v1107 = vrsqrt.pop %v992
  %v1108 = vmul.f32 %v1107, %v992
  %v1109 = vmul.f32 %v1108, %v1107
  %v1110 = vmul.f32 0.5, %v1109
  %v1111 = vsub.f32 1.5, %v1110
  %v1112 = vmul.f32 %v1107, %v1111
  %vm1113 = vweird.f32 %v992
  %vm1114 = vweird.f32 %v1107
  %vm1115 = vmor %vm1113, %vm1114
  %v1116 = vsel %vm1115, %v1107, %v1112
  %v1117 = vrsqrt.pop %v993
  %v1118 = vmul.f32 %v1117, %v993
  %v1119 = vmul.f32 %v1118, %v1117
  %v1120 = vmul.f32 0.5, %v1119
  %v1121 = vsub.f32 1.5, %v1120
  %v1122 = vmul.f32 %v1117, %v1121
  %vm1123 = vweird.f32 %v993
  %vm1124 = vweird.f32 %v1117
  %vm1125 = vmor %vm1123, %vm1124
  %v1126 = vsel %vm1125, %v1117, %v1122
  %v1127 = vrsqrt.pop %v994
  %v1128 = vmul.f32 %v1127, %v994
  %v1129 = vmul.f32 %v1128, %v1127
  %v1130 = vmul.f32 0.5, %v1129
  %v1131 = vsub.f32 1.5, %v1130
  %v1132 = vmul.f32 %v1127, %v1131
  %vm1133 = vweird.f32 %v994
  %vm1134 = vweird.f32 %v1127
  %vm1135 = vmor %vm1133, %vm1134
  %v1136 = vsel %vm1135, %v1127, %v1132
  %v1137 = vrsqrt.pop %v995
  %v1138 = vmul.f32 %v1137, %v995
  %v1139 = vmul.f32 %v1138, %v1137
  %v1140 = vmul.f32 0.5, %v1139
  %v1141 = vsub.f32 1.5, %v1140
  %v1142 = vmul.f32 %v1137, %v1141
  %vm1143 = vweird.f32 %v995
  %vm1144 = vweird.f32 %v1137
  %vm1145 = vmor %vm1143, %vm1144
  %v1146 = vsel %vm1145, %v1137, %v1142
  %v1147 = vrsqrt.pop %v996
  %v1148 = vmul.f32 %v1147, %v996
  %v1149 = vmul.f32 %v1148, %v1147
  %v1150 = vmul.f32 0.5, %v1149
  %v1151 = vsub.f32 1.5, %v1150
  %v1152 = vmul.f32 %v1147, %v1151
  %vm1153 = vweird.f32 %v996
  %vm1154 = vweird.f32 %v1147
  %vm1155 = vmor %vm1153, %vm1154
  %v1156 = vsel %vm1155, %v1147, %v1152
  %v1157 = vmul.f32 %v965, %v1006
  %v1158 = vmul.f32 %v966, %v1016
  %v1159 = vmul.f32 %v967, %v1026
  %v1160 = vmul.f32 %v968, %v1036
  %v1161 = vmul.f32 %v969, %v1046
  %v1162 = vmul.f32 %v970, %v1056
  %v1163 = vmul.f32 %v971, %v1066
  %v1164 = vmul.f32 %v972, %v1076
  %v1165 = vmul.f32 %v973, %v1086
  %v1166 = vmul.f32 %v974, %v1096
  %v1167 = vmul.f32 %v975, %v1106
  %v1168 = vmul.f32 %v976, %v1116
  %v1169 = vmul.f32 %v977, %v1126
  %v1170 = vmul.f32 %v978, %v1136
  %v1171 = vmul.f32 %v979, %v1146
  %v1172 = vmul.f32 %v980, %v1156
  %1174 = vset.pattern.permute.xlu0 0
  %1175 = vperm.xlu0 %1174, %v1157
  %v1176 = vpop.permute.xlu0 %1175
  %1179 = vset.pattern.permute.xlu0 0
  %1180 = vperm.xlu0 %1179, %v1158
  %v1181 = vpop.permute.xlu0 %1180
  %1184 = vset.pattern.permute.xlu0 0
  %1185 = vperm.xlu0 %1184, %v1159
  %v1186 = vpop.permute.xlu0 %1185
  %1189 = vset.pattern.permute.xlu0 0
  %1190 = vperm.xlu0 %1189, %v1160
  %v1191 = vpop.permute.xlu0 %1190
  %1194 = vset.pattern.permute.xlu0 0
  %1195 = vperm.xlu0 %1194, %v1161
  %v1196 = vpop.permute.xlu0 %1195
  %1199 = vset.pattern.permute.xlu0 0
  %1200 = vperm.xlu0 %1199, %v1162
  %v1201 = vpop.permute.xlu0 %1200
  %1204 = vset.pattern.permute.xlu0 0
  %1205 = vperm.xlu0 %1204, %v1163
  %v1206 = vpop.permute.xlu0 %1205
  %1209 = vset.pattern.permute.xlu0 0
  %1210 = vperm.xlu0 %1209, %v1164
  %v1211 = vpop.permute.xlu0 %1210
  %1214 = vset.pattern.permute.xlu0 0
  %1215 = vperm.xlu0 %1214, %v1165
  %v1216 = vpop.permute.xlu0 %1215
  %1219 = vset.pattern.permute.xlu0 0
  %1220 = vperm.xlu0 %1219, %v1166
  %v1221 = vpop.permute.xlu0 %1220
  %1224 = vset.pattern.permute.xlu0 0
  %1225 = vperm.xlu0 %1224, %v1167
  %v1226 = vpop.permute.xlu0 %1225
  %1229 = vset.pattern.permute.xlu0 0
  %1230 = vperm.xlu0 %1229, %v1168
  %v1231 = vpop.permute.xlu0 %1230
  %1234 = vset.pattern.permute.xlu0 0
  %1235 = vperm.xlu0 %1234, %v1169
  %v1236 = vpop.permute.xlu0 %1235
  %1239 = vset.pattern.permute.xlu0 0
  %1240 = vperm.xlu0 %1239, %v1170
  %v1241 = vpop.permute.xlu0 %1240
  %1244 = vset.pattern.permute.xlu0 0
  %1245 = vperm.xlu0 %1244, %v1171
  %v1246 = vpop.permute.xlu0 %1245
  %1249 = vset.pattern.permute.xlu0 0
  %1250 = vperm.xlu0 %1249, %v1172
  %v1251 = vpop.permute.xlu0 %1250
  %v1253 = vmul.f32 %v869, %v1176
  %v1254 = vmul.f32 %v870, %v1181
  %v1255 = vmul.f32 %v871, %v1186
  %v1256 = vmul.f32 %v872, %v1191
  %v1257 = vmul.f32 %v873, %v1196
  %v1258 = vmul.f32 %v874, %v1201
  %v1259 = vmul.f32 %v875, %v1206
  %v1260 = vmul.f32 %v876, %v1211
  %v1261 = vmul.f32 %v877, %v1216
  %v1262 = vmul.f32 %v878, %v1221
  %v1263 = vmul.f32 %v879, %v1226
  %v1264 = vmul.f32 %v880, %v1231
  %v1265 = vmul.f32 %v881, %v1236
  %v1266 = vmul.f32 %v882, %v1241
  %v1267 = vmul.f32 %v883, %v1246
  %v1268 = vmul.f32 %v884, %v1251
  %v1269 = vld [vmem:[%s3] sm:$0xff]
  %v1270 = vld [vmem:[%s3 + $0x8] sm:$0xff]
  %v1271 = vld [vmem:[%s3 + $0x10] sm:$0xff]
  %v1272 = vld [vmem:[%s3 + $0x18] sm:$0xff]
  %v1273 = vld [vmem:[%s3 + $0x20] sm:$0xff]
  %v1274 = vld [vmem:[%s3 + $0x28] sm:$0xff]
  %v1275 = vld [vmem:[%s3 + $0x30] sm:$0xff]
  %v1276 = vld [vmem:[%s3 + $0x38] sm:$0xff]
  %v1277 = vld [vmem:[%s3 + $0x40] sm:$0xff]
  %v1278 = vld [vmem:[%s3 + $0x48] sm:$0xff]
  %v1279 = vld [vmem:[%s3 + $0x50] sm:$0xff]
  %v1280 = vld [vmem:[%s3 + $0x58] sm:$0xff]
  %v1281 = vld [vmem:[%s3 + $0x60] sm:$0xff]
  %v1282 = vld [vmem:[%s3 + $0x68] sm:$0xff]
  %v1283 = vld [vmem:[%s3 + $0x70] sm:$0xff]
  %v1284 = vld [vmem:[%s3 + $0x78] sm:$0xff]
  %1286 = vset.pattern.permute.xlu0 0
  %1287 = vperm.xlu0 %1286, %v1269
  %v1288 = vpop.permute.xlu0 %1287
  %1291 = vset.pattern.permute.xlu0 0
  %1292 = vperm.xlu0 %1291, %v1270
  %v1293 = vpop.permute.xlu0 %1292
  %1296 = vset.pattern.permute.xlu0 0
  %1297 = vperm.xlu0 %1296, %v1271
  %v1298 = vpop.permute.xlu0 %1297
  %1301 = vset.pattern.permute.xlu0 0
  %1302 = vperm.xlu0 %1301, %v1272
  %v1303 = vpop.permute.xlu0 %1302
  %1306 = vset.pattern.permute.xlu0 0
  %1307 = vperm.xlu0 %1306, %v1273
  %v1308 = vpop.permute.xlu0 %1307
  %1311 = vset.pattern.permute.xlu0 0
  %1312 = vperm.xlu0 %1311, %v1274
  %v1313 = vpop.permute.xlu0 %1312
  %1316 = vset.pattern.permute.xlu0 0
  %1317 = vperm.xlu0 %1316, %v1275
  %v1318 = vpop.permute.xlu0 %1317
  %1321 = vset.pattern.permute.xlu0 0
  %1322 = vperm.xlu0 %1321, %v1276
  %v1323 = vpop.permute.xlu0 %1322
  %1326 = vset.pattern.permute.xlu0 0
  %1327 = vperm.xlu0 %1326, %v1277
  %v1328 = vpop.permute.xlu0 %1327
  %1331 = vset.pattern.permute.xlu0 0
  %1332 = vperm.xlu0 %1331, %v1278
  %v1333 = vpop.permute.xlu0 %1332
  %1336 = vset.pattern.permute.xlu0 0
  %1337 = vperm.xlu0 %1336, %v1279
  %v1338 = vpop.permute.xlu0 %1337
  %1341 = vset.pattern.permute.xlu0 0
  %1342 = vperm.xlu0 %1341, %v1280
  %v1343 = vpop.permute.xlu0 %1342
  %1346 = vset.pattern.permute.xlu0 0
  %1347 = vperm.xlu0 %1346, %v1281
  %v1348 = vpop.permute.xlu0 %1347
  %1351 = vset.pattern.permute.xlu0 0
  %1352 = vperm.xlu0 %1351, %v1282
  %v1353 = vpop.permute.xlu0 %1352
  %1356 = vset.pattern.permute.xlu0 0
  %1357 = vperm.xlu0 %1356, %v1283
  %v1358 = vpop.permute.xlu0 %1357
  %1361 = vset.pattern.permute.xlu0 0
  %1362 = vperm.xlu0 %1361, %v1284
  %v1363 = vpop.permute.xlu0 %1362
  %v1365 = vadd.f32 %v1253, %v1288
  %v1366 = vadd.f32 %v1254, %v1293
  %v1367 = vadd.f32 %v1255, %v1298
  %v1368 = vadd.f32 %v1256, %v1303
  %v1369 = vadd.f32 %v1257, %v1308
  %v1370 = vadd.f32 %v1258, %v1313
  %v1371 = vadd.f32 %v1259, %v1318
  %v1372 = vadd.f32 %v1260, %v1323
  %v1373 = vadd.f32 %v1261, %v1328
  %v1374 = vadd.f32 %v1262, %v1333
  %v1375 = vadd.f32 %v1263, %v1338
  %v1376 = vadd.f32 %v1264, %v1343
  %v1377 = vadd.f32 %v1265, %v1348
  %v1378 = vadd.f32 %v1266, %v1353
  %v1379 = vadd.f32 %v1267, %v1358
  %v1380 = vadd.f32 %v1268, %v1363
  %1381 = vst.msk [vmem:[%s4] sm:$0xff] %vm804, %v1365
  %1382 = vst.msk [vmem:[%s4 + $0x8] sm:$0xff] %vm804, %v1366
  %1383 = vst.msk [vmem:[%s4 + $0x10] sm:$0xff] %vm804, %v1367
  %1384 = vst.msk [vmem:[%s4 + $0x18] sm:$0xff] %vm804, %v1368
  %1385 = vst.msk [vmem:[%s4 + $0x20] sm:$0xff] %vm804, %v1369
  %1386 = vst.msk [vmem:[%s4 + $0x28] sm:$0xff] %vm804, %v1370
  %1387 = vst.msk [vmem:[%s4 + $0x30] sm:$0xff] %vm804, %v1371
  %1388 = vst.msk [vmem:[%s4 + $0x38] sm:$0xff] %vm804, %v1372
  %1389 = vst.msk [vmem:[%s4 + $0x40] sm:$0xff] %vm804, %v1373
  %1390 = vst.msk [vmem:[%s4 + $0x48] sm:$0xff] %vm804, %v1374
  %1391 = vst.msk [vmem:[%s4 + $0x50] sm:$0xff] %vm804, %v1375
  %1392 = vst.msk [vmem:[%s4 + $0x58] sm:$0xff] %vm804, %v1376
  %1393 = vst.msk [vmem:[%s4 + $0x60] sm:$0xff] %vm804, %v1377
  %1394 = vst.msk [vmem:[%s4 + $0x68] sm:$0xff] %vm804, %v1378
  %1395 = vst.msk [vmem:[%s4 + $0x70] sm:$0xff] %vm804, %v1379
  %1396 = vst.msk [vmem:[%s4 + $0x78] sm:$0xff] %vm804, %v1380
  // Predicated region
  $region18: #{relu_conv1x1_bn.1} parent=0 // pred_check
    _
  $region19: #{relu_conv1x1_bn.1} parent=0 // pred_check_branch
    %1398 = sbr.rel (0) target = $region21
  $region20: #{relu_conv1x1_bn.1} parent=0 // pred_region
    _
  $region21: #{relu_conv1x1_bn.1} parent=0 // pred_fallthru
    _
  // Predicated region
  $region22: #{relu_conv1x1_bn.1} parent=0 // pred_check
    _
  $region23: #{relu_conv1x1_bn.1} parent=0 // pred_check_branch
    %1400 = sbr.rel (0) target = $region25
  $region24: #{relu_conv1x1_bn.1} parent=0 // pred_region
    _
  $region25: #{relu_conv1x1_bn.1} parent=0 // pred_fallthru
    _

</llo_original>
